<compile_context>
chip_gen: v6e
topology: v6e:2x2x1
jax: 0.10.0
libtpu: 0.0.40
codegen_flags: <defaults>
</compile_context>

<pallas_src>
import functools

import jax
import jax.numpy as jnp
from jax import lax
from jax.experimental import pallas as pl
from jax.experimental.pallas import tpu as pltpu


_BLOCK_ROWS = 2048  # rows per grid step (multiple of 16 for bf16 sublane packing)


def _round_up(n, m):
    return ((n + m - 1) // m) * m


def ernn_kernel(x_ref, h_ref, wx_ref, wh_ref, o_ref):
    # x_ref: (TR, input_dim), h_ref: (TR, hidden*edge)   [bf16 or f32]
    # wx_ref: (input_dim, hidden), wh_ref: (hidden*edge, hidden)  [resident]
    # Two MXU matmuls replace cat([x, h]) @ W.T; accumulate in f32.
    z = jnp.dot(x_ref[...], wx_ref[...], preferred_element_type=jnp.float32)
    z = z + jnp.dot(h_ref[...], wh_ref[...], preferred_element_type=jnp.float32)

    # layer_norm over the last dim, eps=1e-5, no learnable affine (f32 math).
    mean = jnp.mean(z, axis=-1, keepdims=True)
    centered = z - mean
    var = jnp.mean(centered * centered, axis=-1, keepdims=True)
    zn = centered * lax.rsqrt(var + 1e-5)

    # LeakyReLU(negative_slope=0.02)
    o_ref[...] = jnp.where(zn >= 0, zn, 0.02 * zn).astype(o_ref.dtype)


def prepare_weights(weight, input_dim, compute_dtype=jnp.bfloat16):
    """Hoisted off the per-step critical path: transpose + split the torch-layout
    Linear weight (hidden, input_dim + hidden*edge) once, cast to compute dtype."""
    w_t = weight.T
    wx = w_t[:input_dim, :].astype(compute_dtype)   # (input_dim, hidden)
    wh = w_t[input_dim:, :].astype(compute_dtype)   # (hidden*edge, hidden)
    return wx, wh


@jax.jit
def ernn_forward(x, h, wx, wh):
    """x: (B, N, input_dim), h: (B, N, hidden*edge),
    wx/wh: pre-split weights from prepare_weights()."""
    B, N, input_dim = x.shape
    hdim = h.shape[-1]
    hidden = wx.shape[1]
    compute_dtype = wx.dtype
    rows = B * N

    x2d = x.reshape(rows, input_dim).astype(compute_dtype)
    h2d = h.reshape(rows, hdim).astype(compute_dtype)

    # Row tile: multiple of 16 (bf16 sublane tile); pad rows to a tile multiple.
    tr = min(_BLOCK_ROWS, _round_up(rows, 16))
    rows_p = _round_up(rows, tr)
    if rows_p != rows:
        pad = rows_p - rows
        x2d = jnp.pad(x2d, ((0, pad), (0, 0)))
        h2d = jnp.pad(h2d, ((0, pad), (0, 0)))

    out2d = pl.pallas_call(
        ernn_kernel,
        out_shape=jax.ShapeDtypeStruct((rows_p, hidden), x.dtype),
        grid=(rows_p // tr,),
        in_specs=[
            pl.BlockSpec((tr, input_dim), lambda i: (i, 0)),
            pl.BlockSpec((tr, hdim), lambda i: (i, 0)),
            pl.BlockSpec((input_dim, hidden), lambda i: (0, 0)),  # resident weight
            pl.BlockSpec((hdim, hidden), lambda i: (0, 0)),       # resident weight
        ],
        out_specs=pl.BlockSpec((tr, hidden), lambda i: (i, 0)),
        compiler_params=pltpu.CompilerParams(
            dimension_semantics=("parallel",)),   # megacore sharding on v7x
    )(x2d, h2d, wx, wh)

    return out2d[:rows].reshape(B, N, hidden)


def init_weight(key, hidden_dim, in_features, gain=1.414):
    # Xavier-uniform, as in the module's parameter_init()
    fan_in, fan_out = in_features, hidden_dim
    bound = gain * (6.0 / (fan_in + fan_out)) ** 0.5
    return jax.random.uniform(
        key, (hidden_dim, in_features), minval=-bound, maxval=bound,
        dtype=jnp.float32)


if __name__ == "__main__":
    # Small shapes: batch=2, nodes=8, input_dim=16, hidden_dim=32, edge_dim=4
    B, N = 2, 8
    input_dim, hidden_dim, edge_dim = 16, 32, 4

    key = jax.random.PRNGKey(0)
    kx, kh, kw = jax.random.split(key, 3)

    x = jax.random.normal(kx, (B, N, input_dim), dtype=jnp.float32)
    h = jax.random.normal(kh, (B, N, hidden_dim * edge_dim), dtype=jnp.float32)
    weight = init_weight(kw, hidden_dim, input_dim + hidden_dim * edge_dim)

    # Weight transpose/split done once, outside the recurrent step.
    wx_bf16, wh_bf16 = prepare_weights(weight, input_dim, jnp.bfloat16)
    wx_f32, wh_f32 = prepare_weights(weight, input_dim, jnp.float32)

    out = ernn_forward(x, h, wx_bf16, wh_bf16)        # production (bf16-input) path
    out_f32 = ernn_forward(x, h, wx_f32, wh_f32)      # full-precision path
    jax.block_until_ready((out, out_f32))

    # Pure-JAX f32 reference (same math as the PyTorch module).
    x1 = jnp.concatenate([x, h], axis=-1)
    x2 = x1 @ weight.T
    mu = x2.mean(-1, keepdims=True)
    var = ((x2 - mu) ** 2).mean(-1, keepdims=True)
    x3 = (x2 - mu) / jnp.sqrt(var + 1e-5)
    ref = jnp.where(x3 >= 0, x3, 0.02 * x3)

    assert jnp.allclose(out_f32, ref, atol=1e-4, rtol=1e-4), "f32 kernel mismatch"
    assert jnp.allclose(out, ref, atol=3e-2, rtol=3e-2), "bf16 kernel mismatch"

    print("KERNEL_OK")
</pallas_src>

<mosaic_0001>
module attributes {stable_mosaic.version = 11 : i64} {
  func.func @ernn_kernel(%arg0: i32, %arg1: memref<16x16xbf16, #tpu.memory_space<vmem>>, %arg2: memref<16x128xbf16, #tpu.memory_space<vmem>>, %arg3: memref<16x32xbf16, #tpu.memory_space<vmem>>, %arg4: memref<128x32xbf16, #tpu.memory_space<vmem>>, %arg5: memref<16x32xf32, #tpu.memory_space<vmem>>) attributes {dimension_semantics = [#tpu.dimension_semantics<parallel>], iteration_bounds = array<i64: 1>, scalar_prefetch = 0 : i64, scratch_operands = 0 : i64, tpu.core_type = #tpu.core_type<tc>, window_params = [{transform_indices = @transform_0, window_bounds = array<i64: 16, 16>}, {transform_indices = @transform_1, window_bounds = array<i64: 16, 128>}, {pipeline_mode = #tpu.pipeline_mode<synchronous>, transform_indices = @transform_2, window_bounds = array<i64: 16, 32>}, {pipeline_mode = #tpu.pipeline_mode<synchronous>, transform_indices = @transform_3, window_bounds = array<i64: 128, 32>}, {transform_indices = @transform_4, window_bounds = array<i64: 16, 32>}]} {
    %c0 = arith.constant 0 : index
    %c0_0 = arith.constant 0 : index
    %0 = vector.load %arg1[%c0, %c0_0] : memref<16x16xbf16, #tpu.memory_space<vmem>>, vector<16x16xbf16>
    %c0_1 = arith.constant 0 : index
    %c0_2 = arith.constant 0 : index
    %1 = vector.load %arg3[%c0_1, %c0_2] : memref<16x32xbf16, #tpu.memory_space<vmem>>, vector<16x32xbf16>
    %cst = arith.constant dense<0.000000e+00> : vector<16x32xf32>
    %2 = tpu.matmul %0, %1, %cst {dimension_numbers = #tpu.dot_dimension_numbers<[1], [0], [0], [1], [0, 0, 1, 1], [], []>} : vector<16x16xbf16>, vector<16x32xbf16>, vector<16x32xf32> -> vector<16x32xf32>
    %c0_3 = arith.constant 0 : index
    %c0_4 = arith.constant 0 : index
    %3 = vector.load %arg2[%c0_3, %c0_4] : memref<16x128xbf16, #tpu.memory_space<vmem>>, vector<16x128xbf16>
    %c0_5 = arith.constant 0 : index
    %c0_6 = arith.constant 0 : index
    %4 = vector.load %arg4[%c0_5, %c0_6] : memref<128x32xbf16, #tpu.memory_space<vmem>>, vector<128x32xbf16>
    %cst_7 = arith.constant dense<0.000000e+00> : vector<16x32xf32>
    %5 = tpu.matmul %3, %4, %cst_7 {dimension_numbers = #tpu.dot_dimension_numbers<[1], [0], [0], [1], [0, 0, 1, 1], [], []>} : vector<16x128xbf16>, vector<128x32xbf16>, vector<16x32xf32> -> vector<16x32xf32>
    %6 = arith.addf %2, %5 : vector<16x32xf32>
    %cst_8 = arith.constant dense<0.000000e+00> : vector<16xf32>
    %7 = vector.multi_reduction <add>, %6, %cst_8 [1] : vector<16x32xf32> to vector<16xf32>
    %8 = vector.shape_cast %7 : vector<16xf32> to vector<16x1xf32>
    %cst_9 = arith.constant 3.200000e+01 : f32
    %9 = vector.broadcast %cst_9 : f32 to vector<16x1xf32>
    %10 = arith.divf %8, %9 : vector<16x1xf32>
    %11 = vector.broadcast %10 : vector<16x1xf32> to vector<16x32xf32>
    %12 = arith.subf %6, %11 : vector<16x32xf32>
    %13 = arith.mulf %12, %12 : vector<16x32xf32>
    %cst_10 = arith.constant dense<0.000000e+00> : vector<16xf32>
    %14 = vector.multi_reduction <add>, %13, %cst_10 [1] : vector<16x32xf32> to vector<16xf32>
    %15 = vector.shape_cast %14 : vector<16xf32> to vector<16x1xf32>
    %cst_11 = arith.constant 3.200000e+01 : f32
    %16 = vector.broadcast %cst_11 : f32 to vector<16x1xf32>
    %17 = arith.divf %15, %16 : vector<16x1xf32>
    %cst_12 = arith.constant 9.99999974E-6 : f32
    %18 = vector.broadcast %cst_12 : f32 to vector<16x1xf32>
    %19 = arith.addf %17, %18 : vector<16x1xf32>
    %20 = math.rsqrt %19 : vector<16x1xf32>
    %21 = vector.broadcast %20 : vector<16x1xf32> to vector<16x32xf32>
    %22 = arith.mulf %12, %21 : vector<16x32xf32>
    %cst_13 = arith.constant 0.000000e+00 : f32
    %23 = vector.broadcast %cst_13 : f32 to vector<16x32xf32>
    %24 = arith.cmpf oge, %22, %23 : vector<16x32xf32>
    %cst_14 = arith.constant 2.000000e-02 : f32
    %25 = vector.broadcast %cst_14 : f32 to vector<16x32xf32>
    %26 = arith.mulf %25, %22 : vector<16x32xf32>
    %27 = arith.select %24, %22, %26 : vector<16x32xi1>, vector<16x32xf32>
    %c0_15 = arith.constant 0 : index
    %c0_16 = arith.constant 0 : index
    %28 = vector.load %arg5[%c0_15, %c0_16] : memref<16x32xf32, #tpu.memory_space<vmem>>, vector<16x32xf32>
    tpu.vector_store %arg5[%c0_15, %c0_16], %27 {strides = array<i32>} : memref<16x32xf32, #tpu.memory_space<vmem>>, vector<16x32xf32>,
    return
  }
  func.func @transform_0(%arg0: i32) -> (i32, i32) {
    %c0_i32 = arith.constant 0 : i32
    %c0_i32_0 = arith.constant 0 : i32
    return %arg0, %c0_i32 : i32, i32
  }
  func.func @transform_1(%arg0: i32) -> (i32, i32) {
    %c0_i32 = arith.constant 0 : i32
    %c0_i32_0 = arith.constant 0 : i32
    return %arg0, %c0_i32 : i32, i32
  }
  func.func @transform_2(%arg0: i32) -> (i32, i32) {
    %c0_i32 = arith.constant 0 : i32
    %c0_i32_0 = arith.constant 0 : i32
    %c0_i32_1 = arith.constant 0 : i32
    return %c0_i32, %c0_i32_0 : i32, i32
  }
  func.func @transform_3(%arg0: i32) -> (i32, i32) {
    %c0_i32 = arith.constant 0 : i32
    %c0_i32_0 = arith.constant 0 : i32
    %c0_i32_1 = arith.constant 0 : i32
    return %c0_i32, %c0_i32_0 : i32, i32
  }
  func.func @transform_4(%arg0: i32) -> (i32, i32) {
    %c0_i32 = arith.constant 0 : i32
    %c0_i32_0 = arith.constant 0 : i32
    return %arg0, %c0_i32 : i32, i32
  }
}

</mosaic_0001>

<llo_original>
// kernel: ernn_forward.1
$region0: #{ernn_forward.1}
  #allocation0 [shape = 'u32[]', space=smem, size = 0x4, offset = 0x4, fixed_abs, tag = 'smem constant byte address 0x4 - core index']
  #allocation1 [shape = 'u32[144,128]{1,0:T(1,128)}', space=vmem, size = 0x12000, scoped, tag = 'internal scratch']
  %s0 = inlined_call_operand.vmem [shape: bf16[16,16], index: 0, kind: input, shape index: {}]
  %s1 = inlined_call_operand.vmem [shape: bf16[16,128], index: 1, kind: input, shape index: {}]
  %s2 = inlined_call_operand.vmem [shape: bf16[16,32], index: 2, kind: input, shape index: {}]
  %s3 = inlined_call_operand.vmem [shape: bf16[128,32], index: 3, kind: input, shape index: {}]
  %s4 = inlined_call_operand.hbm [shape: f32[16,32], index: 4, kind: output, shape index: {}]
  %s5 = sld [smem:[#allocation0]]
  $region26: #{ernn_forward.1} parent=0
    _
  %s7 = ssub.s32 1, %s5
  %s8 = scalar_select 0, %s7, %s5
  $region1: #{ernn_forward.1} parent=0
    #allocation2 [shape = 'u8[8192]{0}', space=vmem, size = 0x2000, scoped, tag = 'output window, operand 0, single buffered']
    #allocation3 [shape = 's32[1]{0}', space=sflag, size = 0x4, scoped, tag = 'scoped memory for ernn_forward.1']
    %9 = vsyncpa [#allocation3], 0
    // Predicated region
    $region2: #{ernn_forward.1} parent=1 // pred_check
      _
    $region3: #{ernn_forward.1} parent=1 // pred_check_branch
      %11 = sbr.rel (0) target = $region5
    $region4: #{ernn_forward.1} parent=1 // pred_region
      _
    $region5: #{ernn_forward.1} parent=1 // pred_fallthru
      _
    // Predicated region
    $region6: #{ernn_forward.1} parent=1 // pred_check
      _
    $region7: #{ernn_forward.1} parent=1 // pred_check_branch
      %13 = sbr.rel (0) target = $region9
    $region8: #{ernn_forward.1} parent=1 // pred_region
      _
    $region9: #{ernn_forward.1} parent=1 // pred_fallthru
      _
    // Predicated region
    $region10: #{ernn_forward.1} parent=1 // pred_check
      _
    $region11: #{ernn_forward.1} parent=1 // pred_check_branch
      %15 = sbr.rel (0) target = $region13
    $region12: #{ernn_forward.1} parent=1 // pred_region
      _
    $region13: #{ernn_forward.1} parent=1 // pred_fallthru
      _
    // Predicated region
    $region14: #{ernn_forward.1} parent=1 // pred_check
      _
    $region15: #{ernn_forward.1} parent=1 // pred_check_branch
      %17 = sbr.rel (0) target = $region17
    $region16: #{ernn_forward.1} parent=1 // pred_region
      _
    $region17: #{ernn_forward.1} parent=1 // pred_fallthru
      _
    %v19 = vld [vmem:[%s0] sm:$0xf]
    %v20 = vld [vmem:[%s0 + $0x4] sm:$0xf]
    %v21 = vld [vmem:[%s2] sm:$0xf]
    %v22 = vld [vmem:[%s2 + $0x4] sm:$0xf]
    %v23 = vld [vmem:[%s1] sm:$0xf]
    %v24 = vld [vmem:[%s1 + $0x4] sm:$0xf]
    %v25 = vld [vmem:[%s3] sm:$0xf]
    %v26 = vld [vmem:[%s3 + $0x4] sm:$0xf]
    %v27 = vld [vmem:[%s3 + $0x8] sm:$0xf]
    %v28 = vld [vmem:[%s3 + $0xc] sm:$0xf]
    %v29 = vld [vmem:[%s3 + $0x10] sm:$0xf]
    %v30 = vld [vmem:[%s3 + $0x14] sm:$0xf]
    %v31 = vld [vmem:[%s3 + $0x18] sm:$0xf]
    %v32 = vld [vmem:[%s3 + $0x1c] sm:$0xf]
    %v33 = vld [vmem:[%s3 + $0x20] sm:$0xf]
    %v34 = vld [vmem:[%s3 + $0x24] sm:$0xf]
    %v35 = vld [vmem:[%s3 + $0x28] sm:$0xf]
    %v36 = vld [vmem:[%s3 + $0x2c] sm:$0xf]
    %v37 = vld [vmem:[%s3 + $0x30] sm:$0xf]
    %v38 = vld [vmem:[%s3 + $0x34] sm:$0xf]
    %v39 = vld [vmem:[%s3 + $0x38] sm:$0xf]
    %v40 = vld [vmem:[%s3 + $0x3c] sm:$0xf]
    %v43 = vunpack.c.l.b16 %v23
    %v44 = vunpack.c.l.b16 %v24
    %v45 = vpack.c.b16 %v44, %v43
    %v63 = vunpack.c.l.b16 %v25
    %v64 = vunpack.c.l.b16 %v26
    %v65 = vunpack.c.l.b16 %v27
    %v66 = vunpack.c.l.b16 %v28
    %v67 = vunpack.c.l.b16 %v29
    %v68 = vunpack.c.l.b16 %v30
    %v69 = vunpack.c.l.b16 %v31
    %v70 = vunpack.c.l.b16 %v32
    %v71 = vunpack.c.l.b16 %v33
    %v72 = vunpack.c.l.b16 %v34
    %v73 = vunpack.c.l.b16 %v35
    %v74 = vunpack.c.l.b16 %v36
    %v75 = vunpack.c.l.b16 %v37
    %v76 = vunpack.c.l.b16 %v38
    %v77 = vunpack.c.l.b16 %v39
    %v78 = vunpack.c.l.b16 %v40
    %v79 = vpack.c.b16 %v64, %v63
    %v80 = vpack.c.b16 %v66, %v65
    %v81 = vpack.c.b16 %v68, %v67
    %v82 = vpack.c.b16 %v70, %v69
    %v83 = vpack.c.b16 %v72, %v71
    %v84 = vpack.c.b16 %v74, %v73
    %v85 = vpack.c.b16 %v76, %v75
    %v86 = vpack.c.b16 %v78, %v77
    %95 = vmatprep.subr.bf16.mxu0 0
    %96 = vmatpush1.bf16.msra.mxu0 %v86
    %97 = vmatprep.subr.bf16.mxu0 0
    %98 = vmatpush1.bf16.msra.mxu0 %v85
    %99 = vmatprep.subr.bf16.mxu0 0
    %100 = vmatpush1.bf16.msra.mxu0 %v84
    %101 = vmatprep.subr.bf16.mxu0 0
    %102 = vmatpush1.bf16.msra.mxu0 %v83
    %103 = vmatprep.subr.bf16.mxu0 0
    %104 = vmatpush1.bf16.msra.mxu0 %v82
    %105 = vmatprep.subr.bf16.mxu0 0
    %106 = vmatpush1.bf16.msra.mxu0 %v81
    %107 = vmatprep.subr.bf16.mxu0 0
    %108 = vmatpush1.bf16.msra.mxu0 %v80
    %109 = vmatprep.subr.bf16.mxu0 0
    %110 = vmatpush1.bf16.msra.mxu0 %v79
    %111 = vmatprep.subr.bf16.mxu0 0
    %112 = vmatpush2.bf16.msra.mxu0 0
    %113 = vmatprep.subr.bf16.mxu0 0
    %114 = vmatpush2.bf16.msra.mxu0 0
    %115 = vmatprep.subr.bf16.mxu0 0
    %116 = vmatpush2.bf16.msra.mxu0 0
    %117 = vmatprep.subr.bf16.mxu0 0
    %118 = vmatpush2.bf16.msra.mxu0 0
    %119 = vmatprep.subr.bf16.mxu0 0
    %120 = vmatpush2.bf16.msra.mxu0 0
    %121 = vmatprep.subr.bf16.mxu0 0
    %122 = vmatpush2.bf16.msra.mxu0 0
    %123 = vmatprep.subr.bf16.mxu0 0
    %124 = vmatpush2.bf16.msra.mxu0 0
    %125 = vmatprep.subr.bf16.mxu0 0
    %126 = vmatpush2.bf16.msra.mxu0 0
    %127 = vmatprep.mubr.bf16.mxu0 0
    %128 = vmatmul.mubr.bf16.gmra.mxu0 %v45
    %v129 = vpop.f32.mrf.mxu0
    %v130 = vadd.f32 0.0, %v129
    %v131 = vpop.f32.mrf.mxu0
    %v132 = vpop.f32.mrf.mxu0
    %v133 = vadd.f32 0.0, %v132
    %v134 = vpop.f32.mrf.mxu0
    %135 = vdwg.mxu0
    %v138 = vunpack.c.l.b16 %v19
    %v139 = vunpack.c.l.b16 %v20
    %v140 = vpack.c.b16 %v139, %v138
    %v143 = vunpack.c.l.b16 %v21
    %v144 = vunpack.c.l.b16 %v22
    %v145 = vpack.c.b16 %v144, %v143
    %vm147 = vcmask 130048
    %v149 = vsel %vm147, %v140, 0
    %151 = vmatprep.subr.bf16.mxu0 0
    %152 = vmatpush1.bf16.msra.mxu0 0
    %153 = vmatprep.subr.bf16.mxu0 0
    %154 = vmatpush1.bf16.msra.mxu0 0
    %155 = vmatprep.subr.bf16.mxu0 0
    %156 = vmatpush1.bf16.msra.mxu0 0
    %157 = vmatprep.subr.bf16.mxu0 0
    %158 = vmatpush1.bf16.msra.mxu0 0
    %159 = vmatprep.subr.bf16.mxu0 0
    %160 = vmatpush1.bf16.msra.mxu0 0
    %161 = vmatprep.subr.bf16.mxu0 0
    %162 = vmatpush1.bf16.msra.mxu0 0
    %163 = vmatprep.subr.bf16.mxu0 0
    %164 = vmatpush1.bf16.msra.mxu0 0
    %165 = vmatprep.subr.bf16.mxu0 0
    %166 = vmatpush1.bf16.msra.mxu0 %v145
    %167 = vmatprep.subr.bf16.mxu0 0
    %168 = vmatpush2.bf16.msra.mxu0 0
    %169 = vmatprep.subr.bf16.mxu0 0
    %170 = vmatpush2.bf16.msra.mxu0 0
    %171 = vmatprep.subr.bf16.mxu0 0
    %172 = vmatpush2.bf16.msra.mxu0 0
    %173 = vmatprep.subr.bf16.mxu0 0
    %174 = vmatpush2.bf16.msra.mxu0 0
    %175 = vmatprep.subr.bf16.mxu0 0
    %176 = vmatpush2.bf16.msra.mxu0 0
    %177 = vmatprep.subr.bf16.mxu0 0
    %178 = vmatpush2.bf16.msra.mxu0 0
    %179 = vmatprep.subr.bf16.mxu0 0
    %180 = vmatpush2.bf16.msra.mxu0 0
    %181 = vmatprep.subr.bf16.mxu0 0
    %182 = vmatpush2.bf16.msra.mxu0 0
    %183 = vmatprep.mubr.bf16.mxu0 0
    %184 = vmatmul.mubr.bf16.gmra.mxu0 %v149
    %v185 = vpop.f32.mrf.mxu0
    %v186 = vadd.f32 %v130, %v185
    %v187 = vpop.f32.mrf.mxu0
    %v188 = vpop.f32.mrf.mxu0
    %v189 = vadd.f32 %v133, %v188
    %v190 = vpop.f32.mrf.mxu0
    %191 = vdwg.mxu0
    %vm192 = vcmask 261120
    %v193 = vsel %vm192, %v186, 0.0
    %194 = vadd.xlane.f32.xlu0 %v193
    %v195 = vpop.xlane.xlu0 %194
    %v196 = vsel %vm192, %v189, 0.0
    %197 = vadd.xlane.f32.xlu0 %v196
    %v198 = vpop.xlane.xlu0 %197
    %v199 = vrcp.pop 32.0
    %v200 = vmul.f32 %v195, %v199
    %v201 = vmul.f32 %v198, %v199
    %v202 = vsub.f32 %v186, %v200
    %v203 = vsub.f32 %v189, %v201
    %v204 = vmul.f32 %v202, %v202
    %v205 = vmul.f32 %v203, %v203
    %v206 = vsel %vm192, %v204, 0.0
    %207 = vadd.xlane.f32.xlu0 %v206
    %v208 = vpop.xlane.xlu0 %207
    %v209 = vsel %vm192, %v205, 0.0
    %210 = vadd.xlane.f32.xlu0 %v209
    %v211 = vpop.xlane.xlu0 %210
    %v212 = vmul.f32 %v208, %v199
    %v213 = vmul.f32 %v211, %v199
    %v214 = vadd.f32 %v212, 1e-05
    %v215 = vadd.f32 %v213, 1e-05
    %v216 = vrsqrt.pop %v214
    %v217 = vrsqrt.pop %v215
    %v218 = vmul.f32 %v202, %v216
    %v219 = vmul.f32 %v203, %v217
    %vm220 = vcmp.ge.f32.partialorder %v218, 0.0
    %vm221 = vcmp.ge.f32.partialorder %v219, 0.0
    %v222 = vmul.f32 %v218, 0.02
    %v223 = vmul.f32 %v219, 0.02
    %v224 = vsel %vm220, %v218, %v222
    %v225 = vsel %vm221, %v219, %v223
    %226 = vst.msk [vmem:[#allocation2] sm:$0xff] %vm192, %v224
    %227 = vst.msk [vmem:[#allocation2 + $0x8] sm:$0xff] %vm192, %v225
    // Predicated region
    $region18: #{ernn_forward.1} parent=1 // pred_check
      _
    $region19: #{ernn_forward.1} parent=1 // pred_check_branch
      %229 = sbr.rel (0) target = $region21
    $region20: #{ernn_forward.1} parent=1 // pred_region
      %s231 = ssub.s32 256, 256
      %232 = vsyncadd [#allocation3], %s231
      %s233 = sshll.u32 [#allocation2], 4
      %s234 = int_to_ptr.vmem [resolvable:$true] %s233
      %239 = dma.vmem_to_hbm [thread:$0]  %s234, 256, %s4, [#allocation3], 128, 128, 8
    $region21: #{ernn_forward.1} parent=1 // pred_fallthru
      _
    // Predicated region
    $region22: #{ernn_forward.1} parent=1 // pred_check
      _
    $region23: #{ernn_forward.1} parent=1 // pred_check_branch
      %241 = sbr.rel (0) target = $region25
    $region24: #{ernn_forward.1} parent=1 // pred_region
      %242 = dma.done [#allocation3], 256
    $region25: #{ernn_forward.1} parent=1 // pred_fallthru
      _
    %243 = vsyncpa [#allocation3], 1

</llo_original>
